<compile_context>
chip_gen: v6e
topology: v6e:2x2x1
jax: 0.10.0
libtpu: 0.0.40
codegen_flags: <defaults>
</compile_context>

<pallas_src>
import functools

import jax
import jax.numpy as jnp
from jax.experimental import pallas as pl
from jax.experimental.pallas import tpu as pltpu

BN_EPS = 1e-5


# ---------------------------------------------------------------------------
# Fused kernel: Linear + BatchNorm1d (once, into VMEM scratch)  +  cross pooling
# grid = (P_pad // TP,)
# ---------------------------------------------------------------------------
def _cross_pooling_dir_kernel(xb_ref, w_ref, b_ref, gamma_ref, beta_ref,
                              q_ref, v_ref, o_ref, k_scratch, *, G, L, F):
    # ---- K = BN(Linear(gallery_base)) : computed once, kept resident in VMEM ----
    @pl.when(pl.program_id(0) == 0)
    def _():
        x = xb_ref[...]                                               # (G*L, Din)
        y = jnp.dot(x, w_ref[...],
                    preferred_element_type=jnp.float32) + b_ref[...]  # (G*L, F)
        # BatchNorm1d (training mode): biased batch stats over the G*L rows.
        mean = jnp.mean(y, axis=0, keepdims=True)                     # (1, F)
        var = jnp.mean((y - mean) ** 2, axis=0, keepdims=True)        # (1, F)
        y_hat = (y - mean) * jax.lax.rsqrt(var + BN_EPS)
        k_scratch[...] = (y_hat * gamma_ref[...] + beta_ref[...]).reshape(G, L, F)

    # ---- cross pooling for this (TP, F) query tile ----
    q = q_ref[...]                                                    # (TP, F)
    k = k_scratch[...]                                                # (G, L, F)
    v = v_ref[...]                                                    # (G, L, F)

    s = q[:, None, None, :] * k[None]                                 # (TP, G, L, F)
    m = jnp.max(s, axis=2, keepdims=True)                             # (TP, G, 1, F)
    e = jnp.exp(s - m)                                                # (TP, G, L, F)
    num = jnp.sum(e * v[None], axis=2)                                # (TP, G, F)
    den = jnp.sum(e, axis=2)                                          # (TP, G, F)
    # Exact reciprocal keeps rtol<=1e-4 vs. the reference; approx=True would move
    # it fully onto the EUP slot at ~1e-3-class relative error.
    o_ref[...] = num * pl.reciprocal(den, approx=False)


def _round_up(x, m):
    return ((x + m - 1) // m) * m


def cross_pooling_dir(gallery_value, gallery_base, querys, params, *, tp=64):
    G, L, F = gallery_value.shape
    Gb, Lb, Din = gallery_base.shape
    assert (Gb, Lb) == (G, L)
    P, Fq = querys.shape
    assert Fq == F

    # Query-tile size: multiple of 8 sublanes, no larger than needed.
    tp = _round_up(max(8, min(tp, _round_up(P, 8))), 8)
    P_pad = _round_up(P, tp)
    q = querys if P_pad == P else jnp.pad(querys, ((0, P_pad - P), (0, 0)))

    xb = gallery_base.reshape(G * L, Din)
    kernel = functools.partial(_cross_pooling_dir_kernel, G=G, L=L, F=F)

    out = pl.pallas_call(
        kernel,
        out_shape=jax.ShapeDtypeStruct((P_pad, G, F), jnp.float32),
        grid=(P_pad // tp,),
        in_specs=[
            pl.BlockSpec((G * L, Din), lambda p: (0, 0)),    # gallery_base (flat)
            pl.BlockSpec((Din, F), lambda p: (0, 0)),        # W^T
            pl.BlockSpec((1, F), lambda p: (0, 0)),          # Linear bias
            pl.BlockSpec((1, F), lambda p: (0, 0)),          # BN gamma
            pl.BlockSpec((1, F), lambda p: (0, 0)),          # BN beta
            pl.BlockSpec((tp, F), lambda p: (p, 0)),         # query tile
            pl.BlockSpec((G, L, F), lambda p: (0, 0, 0)),    # gallery_value
        ],
        out_specs=pl.BlockSpec((tp, G, F), lambda p: (p, 0, 0)),
        scratch_shapes=[pltpu.VMEM((G, L, F), jnp.float32)],  # persistent K
        # "arbitrary": K scratch is written on step 0 and reused by later steps,
        # so the query-tile axis must run sequentially on one TensorCore.
        compiler_params=pltpu.CompilerParams(
            dimension_semantics=("arbitrary",)),
    )(xb, params["w_t"], params["b"], params["gamma"], params["beta"],
      q, gallery_value)

    return out[:P]


def make_params(key, input_num, output_num):
    # kaiming_uniform_(weight, mode='fan_out'): fan_out = output_num,
    # gain = sqrt(2), bound = sqrt(3) * gain / sqrt(fan_out)
    bound = jnp.sqrt(3.0) * jnp.sqrt(2.0) / jnp.sqrt(float(output_num))
    w = jax.random.uniform(key, (output_num, input_num),
                           minval=-bound, maxval=bound, dtype=jnp.float32)
    return {
        "w_t": w.T,                                          # (Din, F)
        "b": jnp.zeros((1, output_num), jnp.float32),        # featK.bias = 0
        "gamma": jnp.ones((1, output_num), jnp.float32),     # bn.weight = 1
        "beta": jnp.zeros((1, output_num), jnp.float32),     # bn.bias = 0
    }


# ---------------------------------------------------------------------------
# Pure-JAX reference (for correctness check)
# ---------------------------------------------------------------------------
def reference(gallery_value, gallery_base, querys, params):
    G, L, Din = gallery_base.shape
    F = params["w_t"].shape[1]
    y = gallery_base.reshape(G * L, Din) @ params["w_t"] + params["b"]
    mean = jnp.mean(y, axis=0, keepdims=True)
    var = jnp.mean((y - mean) ** 2, axis=0, keepdims=True)
    K = ((y - mean) / jnp.sqrt(var + BN_EPS)) * params["gamma"] + params["beta"]
    K = K.reshape(G, L, F)
    s = querys[:, None, None, :] * K[None]               # (P, G, L, F)
    w = jax.nn.softmax(s, axis=2)
    return jnp.sum(w * gallery_value[None], axis=2)      # (P, G, F)


if __name__ == "__main__":
    # Small shapes consistent with the module's forward (F lane-dense at 128).
    P = 4        # pro_batch (number of queries)
    G = 2        # gal_batch
    L = 8        # gal_len
    Din = 64     # input_num
    F = 128      # output_num == Q_featnum

    key = jax.random.PRNGKey(0)
    k0, k1, k2, k3 = jax.random.split(key, 4)

    gallery_value = jax.random.normal(k0, (G, L, F), dtype=jnp.float32)
    gallery_base = jax.random.normal(k1, (G, L, Din), dtype=jnp.float32)
    querys = jax.random.normal(k2, (P, F), dtype=jnp.float32)
    params = make_params(k3, Din, F)

    out = cross_pooling_dir(gallery_value, gallery_base, querys, params)
    out = jax.block_until_ready(out)

    ref = reference(gallery_value, gallery_base, querys, params)
    assert out.shape == (P, G, F), out.shape
    err = float(jnp.max(jnp.abs(out - ref)))
    assert jnp.allclose(out, ref, rtol=1e-4, atol=1e-5), err

    print("KERNEL_OK")
</pallas_src>

<mosaic_0001>
module attributes {stable_mosaic.version = 11 : i64} {
  func.func @_cross_pooling_dir_kernel(%arg0: i32, %arg1: memref<16x64xf32, #tpu.memory_space<vmem>>, %arg2: memref<64x128xf32, #tpu.memory_space<vmem>>, %arg3: memref<1x128xf32, #tpu.memory_space<vmem>>, %arg4: memref<1x128xf32, #tpu.memory_space<vmem>>, %arg5: memref<1x128xf32, #tpu.memory_space<vmem>>, %arg6: memref<8x128xf32, #tpu.memory_space<vmem>>, %arg7: memref<2x8x128xf32, #tpu.memory_space<vmem>>, %arg8: memref<8x2x128xf32, #tpu.memory_space<vmem>>, %arg9: memref<2x8x128xf32, #tpu.memory_space<vmem>>) attributes {dimension_semantics = [#tpu.dimension_semantics<arbitrary>], iteration_bounds = array<i64: 1>, scalar_prefetch = 0 : i64, scratch_operands = 1 : i64, tpu.core_type = #tpu.core_type<tc>, window_params = [{pipeline_mode = #tpu.pipeline_mode<synchronous>, transform_indices = @transform_0, window_bounds = array<i64: 16, 64>}, {pipeline_mode = #tpu.pipeline_mode<synchronous>, transform_indices = @transform_1, window_bounds = array<i64: 64, 128>}, {pipeline_mode = #tpu.pipeline_mode<synchronous>, transform_indices = @transform_2, window_bounds = array<i64: 1, 128>}, {pipeline_mode = #tpu.pipeline_mode<synchronous>, transform_indices = @transform_3, window_bounds = array<i64: 1, 128>}, {pipeline_mode = #tpu.pipeline_mode<synchronous>, transform_indices = @transform_4, window_bounds = array<i64: 1, 128>}, {transform_indices = @transform_5, window_bounds = array<i64: 8, 128>}, {pipeline_mode = #tpu.pipeline_mode<synchronous>, transform_indices = @transform_6, window_bounds = array<i64: 2, 8, 128>}, {transform_indices = @transform_7, window_bounds = array<i64: 8, 2, 128>}]} {
    %c0_i32 = arith.constant 0 : i32
    %0 = arith.cmpi eq, %arg0, %c0_i32 : i32
    %1 = arith.extui %0 : i1 to i32
    %c0_i32_0 = arith.constant 0 : i32
    %2 = arith.cmpi ne, %1, %c0_i32_0 : i32
    scf.if %2 {
      %c0_13 = arith.constant 0 : index
      %c0_14 = arith.constant 0 : index
      %24 = vector.load %arg1[%c0_13, %c0_14] : memref<16x64xf32, #tpu.memory_space<vmem>>, vector<16x64xf32>
      %c0_15 = arith.constant 0 : index
      %c0_16 = arith.constant 0 : index
      %25 = vector.load %arg2[%c0_15, %c0_16] : memref<64x128xf32, #tpu.memory_space<vmem>>, vector<64x128xf32>
      %cst_17 = arith.constant dense<0.000000e+00> : vector<16x128xf32>
      %26 = tpu.matmul %24, %25, %cst_17 {dimension_numbers = #tpu.dot_dimension_numbers<[1], [0], [0], [1], [0, 0, 1, 1], [], []>} : vector<16x64xf32>, vector<64x128xf32>, vector<16x128xf32> -> vector<16x128xf32>
      %c0_18 = arith.constant 0 : index
      %c0_19 = arith.constant 0 : index
      %27 = vector.load %arg3[%c0_18, %c0_19] : memref<1x128xf32, #tpu.memory_space<vmem>>, vector<1x128xf32>
      %28 = vector.broadcast %27 : vector<1x128xf32> to vector<16x128xf32>
      %29 = arith.addf %26, %28 : vector<16x128xf32>
      %cst_20 = arith.constant dense<0.000000e+00> : vector<128xf32>
      %30 = vector.multi_reduction <add>, %29, %cst_20 [0] : vector<16x128xf32> to vector<128xf32>
      %31 = vector.shape_cast %30 : vector<128xf32> to vector<1x128xf32>
      %cst_21 = arith.constant 1.600000e+01 : f32
      %32 = vector.broadcast %cst_21 : f32 to vector<1x128xf32>
      %33 = arith.divf %31, %32 : vector<1x128xf32>
      %34 = vector.broadcast %33 : vector<1x128xf32> to vector<16x128xf32>
      %35 = arith.subf %29, %34 : vector<16x128xf32>
      %36 = arith.mulf %35, %35 : vector<16x128xf32>
      %cst_22 = arith.constant dense<0.000000e+00> : vector<128xf32>
      %37 = vector.multi_reduction <add>, %36, %cst_22 [0] : vector<16x128xf32> to vector<128xf32>
      %38 = vector.shape_cast %37 : vector<128xf32> to vector<1x128xf32>
      %cst_23 = arith.constant 1.600000e+01 : f32
      %39 = vector.broadcast %cst_23 : f32 to vector<1x128xf32>
      %40 = arith.divf %38, %39 : vector<1x128xf32>
      %41 = vector.broadcast %33 : vector<1x128xf32> to vector<16x128xf32>
      %42 = arith.subf %29, %41 : vector<16x128xf32>
      %cst_24 = arith.constant 9.99999974E-6 : f32
      %43 = vector.broadcast %cst_24 : f32 to vector<1x128xf32>
      %44 = arith.addf %40, %43 : vector<1x128xf32>
      %45 = math.rsqrt %44 : vector<1x128xf32>
      %46 = vector.broadcast %45 : vector<1x128xf32> to vector<16x128xf32>
      %47 = arith.mulf %42, %46 : vector<16x128xf32>
      %c0_25 = arith.constant 0 : index
      %c0_26 = arith.constant 0 : index
      %48 = vector.load %arg4[%c0_25, %c0_26] : memref<1x128xf32, #tpu.memory_space<vmem>>, vector<1x128xf32>
      %49 = vector.broadcast %48 : vector<1x128xf32> to vector<16x128xf32>
      %50 = arith.mulf %47, %49 : vector<16x128xf32>
      %c0_27 = arith.constant 0 : index
      %c0_28 = arith.constant 0 : index
      %51 = vector.load %arg5[%c0_27, %c0_28] : memref<1x128xf32, #tpu.memory_space<vmem>>, vector<1x128xf32>
      %52 = vector.broadcast %51 : vector<1x128xf32> to vector<16x128xf32>
      %53 = arith.addf %50, %52 : vector<16x128xf32>
      %54 = vector.shape_cast %53 : vector<16x128xf32> to vector<2x8x128xf32>
      %c0_29 = arith.constant 0 : index
      %c0_30 = arith.constant 0 : index
      %c0_31 = arith.constant 0 : index
      %55 = vector.load %arg9[%c0_29, %c0_30, %c0_31] : memref<2x8x128xf32, #tpu.memory_space<vmem>>, vector<2x8x128xf32>
      tpu.vector_store %arg9[%c0_29, %c0_30, %c0_31], %54 {strides = array<i32>} : memref<2x8x128xf32, #tpu.memory_space<vmem>>, vector<2x8x128xf32>,
    } else {
    }
    %c0 = arith.constant 0 : index
    %c0_1 = arith.constant 0 : index
    %3 = vector.load %arg6[%c0, %c0_1] : memref<8x128xf32, #tpu.memory_space<vmem>>, vector<8x128xf32>
    %c0_2 = arith.constant 0 : index
    %c0_3 = arith.constant 0 : index
    %c0_4 = arith.constant 0 : index
    %4 = vector.load %arg9[%c0_2, %c0_3, %c0_4] : memref<2x8x128xf32, #tpu.memory_space<vmem>>, vector<2x8x128xf32>
    %c0_5 = arith.constant 0 : index
    %c0_6 = arith.constant 0 : index
    %c0_7 = arith.constant 0 : index
    %5 = vector.load %arg7[%c0_5, %c0_6, %c0_7] : memref<2x8x128xf32, #tpu.memory_space<vmem>>, vector<2x8x128xf32>
    %6 = vector.shape_cast %3 : vector<8x128xf32> to vector<8x1x1x128xf32>
    %7 = vector.shape_cast %4 : vector<2x8x128xf32> to vector<1x2x8x128xf32>
    %8 = vector.broadcast %6 : vector<8x1x1x128xf32> to vector<8x2x8x128xf32>
    %9 = vector.broadcast %7 : vector<1x2x8x128xf32> to vector<8x2x8x128xf32>
    %10 = arith.mulf %8, %9 : vector<8x2x8x128xf32>
    %cst = arith.constant dense<0xFF800000> : vector<8x2x128xf32>
    %11 = vector.multi_reduction <maximumf>, %10, %cst [2] : vector<8x2x8x128xf32> to vector<8x2x128xf32>
    %12 = vector.shape_cast %11 : vector<8x2x128xf32> to vector<8x2x1x128xf32>
    %13 = vector.broadcast %12 : vector<8x2x1x128xf32> to vector<8x2x8x128xf32>
    %14 = arith.subf %10, %13 : vector<8x2x8x128xf32>
    %15 = math.exp %14 : vector<8x2x8x128xf32>
    %16 = vector.shape_cast %5 : vector<2x8x128xf32> to vector<1x2x8x128xf32>
    %17 = vector.broadcast %16 : vector<1x2x8x128xf32> to vector<8x2x8x128xf32>
    %18 = arith.mulf %15, %17 : vector<8x2x8x128xf32>
    %cst_8 = arith.constant dense<0.000000e+00> : vector<8x2x128xf32>
    %19 = vector.multi_reduction <add>, %18, %cst_8 [2] : vector<8x2x8x128xf32> to vector<8x2x128xf32>
    %cst_9 = arith.constant dense<0.000000e+00> : vector<8x2x128xf32>
    %20 = vector.multi_reduction <add>, %15, %cst_9 [2] : vector<8x2x8x128xf32> to vector<8x2x128xf32>
    %21 = tpu.reciprocal %20 : vector<8x2x128xf32> -> vector<8x2x128xf32>
    %22 = arith.mulf %19, %21 : vector<8x2x128xf32>
    %c0_10 = arith.constant 0 : index
    %c0_11 = arith.constant 0 : index
    %c0_12 = arith.constant 0 : index
    %23 = vector.load %arg8[%c0_10, %c0_11, %c0_12] : memref<8x2x128xf32, #tpu.memory_space<vmem>>, vector<8x2x128xf32>
    tpu.vector_store %arg8[%c0_10, %c0_11, %c0_12], %22 {strides = array<i32>} : memref<8x2x128xf32, #tpu.memory_space<vmem>>, vector<8x2x128xf32>,
    return
  }
  func.func @transform_0(%arg0: i32) -> (i32, i32) {
    %c0_i32 = arith.constant 0 : i32
    %c0_i32_0 = arith.constant 0 : i32
    %c0_i32_1 = arith.constant 0 : i32
    return %c0_i32, %c0_i32_0 : i32, i32
  }
  func.func @transform_1(%arg0: i32) -> (i32, i32) {
    %c0_i32 = arith.constant 0 : i32
    %c0_i32_0 = arith.constant 0 : i32
    %c0_i32_1 = arith.constant 0 : i32
    return %c0_i32, %c0_i32_0 : i32, i32
  }
  func.func @transform_2(%arg0: i32) -> (i32, i32) {
    %c0_i32 = arith.constant 0 : i32
    %c0_i32_0 = arith.constant 0 : i32
    %c0_i32_1 = arith.constant 0 : i32
    return %c0_i32, %c0_i32_0 : i32, i32
  }
  func.func @transform_3(%arg0: i32) -> (i32, i32) {
    %c0_i32 = arith.constant 0 : i32
    %c0_i32_0 = arith.constant 0 : i32
    %c0_i32_1 = arith.constant 0 : i32
    return %c0_i32, %c0_i32_0 : i32, i32
  }
  func.func @transform_4(%arg0: i32) -> (i32, i32) {
    %c0_i32 = arith.constant 0 : i32
    %c0_i32_0 = arith.constant 0 : i32
    %c0_i32_1 = arith.constant 0 : i32
    return %c0_i32, %c0_i32_0 : i32, i32
  }
  func.func @transform_5(%arg0: i32) -> (i32, i32) {
    %c0_i32 = arith.constant 0 : i32
    %c0_i32_0 = arith.constant 0 : i32
    return %arg0, %c0_i32 : i32, i32
  }
  func.func @transform_6(%arg0: i32) -> (i32, i32, i32) {
    %c0_i32 = arith.constant 0 : i32
    %c0_i32_0 = arith.constant 0 : i32
    %c0_i32_1 = arith.constant 0 : i32
    %c0_i32_2 = arith.constant 0 : i32
    return %c0_i32, %c0_i32_0, %c0_i32_1 : i32, i32, i32
  }
  func.func @transform_7(%arg0: i32) -> (i32, i32, i32) {
    %c0_i32 = arith.constant 0 : i32
    %c0_i32_0 = arith.constant 0 : i32
    %c0_i32_1 = arith.constant 0 : i32
    return %arg0, %c0_i32, %c0_i32_0 : i32, i32, i32
  }
}

</mosaic_0001>

<llo_original>
// kernel: tpu_custom_call.1
$region0: #{tpu_custom_call.1}
  #allocation0 [shape = 'u32[]', space=smem, size = 0x4, offset = 0x4, fixed_abs, tag = 'smem constant byte address 0x4 - core index']
  #allocation1 [shape = 'u32[144,128]{1,0:T(1,128)}', space=vmem, size = 0x12000, scoped, tag = 'internal scratch']
  #allocation2 [shape = 'f32[2,8,128]{2,1,0:T(8,128)}', space=vmem, size = 0x2000, scoped, tag = 'scratch operand']
  %s0 = inlined_call_operand.hbm [shape: f32[16,64], index: 0, kind: input, shape index: {}]
  %s1 = inlined_call_operand.hbm [shape: f32[64,128], index: 1, kind: input, shape index: {}]
  %s2 = inlined_call_operand.vmem [shape: f32[1,128], index: 2, kind: input, shape index: {}]
  %s3 = inlined_call_operand.hbm [shape: f32[1,128], index: 3, kind: input, shape index: {}]
  %s4 = inlined_call_operand.hbm [shape: f32[1,128], index: 4, kind: input, shape index: {}]
  %s5 = inlined_call_operand.vmem [shape: f32[8,128], index: 5, kind: input, shape index: {}]
  %s6 = inlined_call_operand.hbm [shape: f32[2,8,128], index: 6, kind: input, shape index: {}]
  %s7 = inlined_call_operand.hbm [shape: f32[8,2,128], index: 7, kind: output, shape index: {}]
  %s8 = sld [smem:[#allocation0]]
  $region62: #{tpu_custom_call.1} parent=0
    _
  %s10 = ssub.s32 1, %s8
  %s11 = scalar_select 0, %s10, %s8
  $region1: #{tpu_custom_call.1} parent=0
    #allocation3 [shape = 'u8[8192]{0}', space=vmem, size = 0x2000, scoped, tag = 'input window, operand 0, single buffered']
    #allocation4 [shape = 's32[1]{0}', space=sflag, size = 0x4, scoped, tag = 'scoped memory for tpu_custom_call.1']
    #allocation5 [shape = 's32[1]{0}', space=sflag, size = 0x4, scoped, tag = 'scoped memory for tpu_custom_call.1']
    #allocation6 [shape = 'u8[32768]{0}', space=vmem, size = 0x8000, scoped, tag = 'input window, operand 1, single buffered']
    #allocation7 [shape = 's32[1]{0}', space=sflag, size = 0x4, scoped, tag = 'scoped memory for tpu_custom_call.1']
    #allocation8 [shape = 'u8[512]{0}', space=vmem, size = 0x400, scoped, tag = 'input window, operand 3, single buffered']
    #allocation9 [shape = 'u8[512]{0}', space=vmem, size = 0x400, scoped, tag = 'input window, operand 4, single buffered']
    #allocation10 [shape = 's32[1]{0}', space=sflag, size = 0x4, scoped, tag = 'scoped memory for tpu_custom_call.1']
    #allocation11 [shape = 'u8[8192]{0}', space=vmem, size = 0x2000, scoped, tag = 'input window, operand 6, single buffered']
    #allocation12 [shape = 'u8[8192]{0}', space=vmem, size = 0x2000, scoped, tag = 'output window, operand 0, single buffered']
    %12 = vsyncpa [#allocation4], 0
    %13 = vsyncpa [#allocation7], 0
    %14 = vsyncpa [#allocation10], 0
    %15 = vsyncpa [#allocation5], 0
    // Predicated region
    $region2: #{tpu_custom_call.1} parent=1 // pred_check
      _
    $region3: #{tpu_custom_call.1} parent=1 // pred_check_branch
      %17 = sbr.rel (0) target = $region5
    $region4: #{tpu_custom_call.1} parent=1 // pred_region
      %s19 = ssub.s32 256, 256
      %20 = vsyncadd [#allocation4], %s19
      %s21 = sshll.u32 [#allocation3], 4
      %s22 = int_to_ptr.vmem [resolvable:$true] %s21
      %27 = dma.hbm_to_vmem [thread:$0]  %s0, 256, %s22, [#allocation4], 128, 128, 8
    $region5: #{tpu_custom_call.1} parent=1 // pred_fallthru
      _
    // Predicated region
    $region6: #{tpu_custom_call.1} parent=1 // pred_check
      _
    $region7: #{tpu_custom_call.1} parent=1 // pred_check_branch
      %29 = sbr.rel (0) target = $region9
    $region8: #{tpu_custom_call.1} parent=1 // pred_region
      %s31 = ssub.s32 1024, 1024
      %32 = vsyncadd [#allocation7], %s31
      %s33 = sshll.u32 [#allocation6], 4
      %s34 = int_to_ptr.vmem [resolvable:$true] %s33
      %39 = dma.hbm_to_vmem [thread:$0]  %s1, 1024, %s34, [#allocation7], 128, 128, 8
    $region9: #{tpu_custom_call.1} parent=1 // pred_fallthru
      _
    // Predicated region
    $region10: #{tpu_custom_call.1} parent=1 // pred_check
      _
    $region11: #{tpu_custom_call.1} parent=1 // pred_check_branch
      %41 = sbr.rel (0) target = $region13
    $region12: #{tpu_custom_call.1} parent=1 // pred_region
      _
    $region13: #{tpu_custom_call.1} parent=1 // pred_fallthru
      _
    // Predicated region
    $region14: #{tpu_custom_call.1} parent=1 // pred_check
      _
    $region15: #{tpu_custom_call.1} parent=1 // pred_check_branch
      %43 = sbr.rel (0) target = $region17
    $region16: #{tpu_custom_call.1} parent=1 // pred_region
      %s45 = ssub.s32 16, 16
      %46 = vsyncadd [#allocation7], %s45
      %s48 = sshll.u32 [#allocation8], 4
      %s49 = int_to_ptr.vmem [resolvable:$true] %s48
      %51 = dma.hbm_to_vmem [thread:$0]  %s3, 16, %s49, [#allocation7]
    $region17: #{tpu_custom_call.1} parent=1 // pred_fallthru
      _
    // Predicated region
    $region18: #{tpu_custom_call.1} parent=1 // pred_check
      _
    $region19: #{tpu_custom_call.1} parent=1 // pred_check_branch
      %53 = sbr.rel (0) target = $region21
    $region20: #{tpu_custom_call.1} parent=1 // pred_region
      %s55 = ssub.s32 16, 16
      %56 = vsyncadd [#allocation10], %s55
      %s58 = sshll.u32 [#allocation9], 4
      %s59 = int_to_ptr.vmem [resolvable:$true] %s58
      %61 = dma.hbm_to_vmem [thread:$0]  %s4, 16, %s59, [#allocation10]
    $region21: #{tpu_custom_call.1} parent=1 // pred_fallthru
      _
    // Predicated region
    $region22: #{tpu_custom_call.1} parent=1 // pred_check
      _
    $region23: #{tpu_custom_call.1} parent=1 // pred_check_branch
      %63 = sbr.rel (0) target = $region25
    $region24: #{tpu_custom_call.1} parent=1 // pred_region
      _
    $region25: #{tpu_custom_call.1} parent=1 // pred_fallthru
      _
    // Predicated region
    $region26: #{tpu_custom_call.1} parent=1 // pred_check
      _
    $region27: #{tpu_custom_call.1} parent=1 // pred_check_branch
      %65 = sbr.rel (0) target = $region29
    $region28: #{tpu_custom_call.1} parent=1 // pred_region
      %s67 = ssub.s32 256, 256
      %68 = vsyncadd [#allocation10], %s67
      %s69 = sshll.u32 [#allocation11], 4
      %s70 = int_to_ptr.vmem [resolvable:$true] %s69
      %75 = dma.hbm_to_vmem [thread:$0]  %s6, 256, %s70, [#allocation10], 128, 128, 8
    $region29: #{tpu_custom_call.1} parent=1 // pred_fallthru
      _
    // Predicated region
    $region30: #{tpu_custom_call.1} parent=1 // pred_check
      _
    $region31: #{tpu_custom_call.1} parent=1 // pred_check_branch
      %77 = sbr.rel (0) target = $region33
    $region32: #{tpu_custom_call.1} parent=1 // pred_region
      %78 = dma.done [#allocation4], 256
    $region33: #{tpu_custom_call.1} parent=1 // pred_fallthru
      _
    // Predicated region
    $region34: #{tpu_custom_call.1} parent=1 // pred_check
      _
    $region35: #{tpu_custom_call.1} parent=1 // pred_check_branch
      %80 = sbr.rel (0) target = $region37
    $region36: #{tpu_custom_call.1} parent=1 // pred_region
      %81 = dma.done [#allocation7], 1024
    $region37: #{tpu_custom_call.1} parent=1 // pred_fallthru
      _
    // Predicated region
    $region38: #{tpu_custom_call.1} parent=1 // pred_check
      _
    $region39: #{tpu_custom_call.1} parent=1 // pred_check_branch
      %83 = sbr.rel (0) target = $region41
    $region40: #{tpu_custom_call.1} parent=1 // pred_region
      %84 = dma.done [#allocation7], 16
    $region41: #{tpu_custom_call.1} parent=1 // pred_fallthru
      _
    // Predicated region
    $region42: #{tpu_custom_call.1} parent=1 // pred_check
      _
    $region43: #{tpu_custom_call.1} parent=1 // pred_check_branch
      %86 = sbr.rel (0) target = $region45
    $region44: #{tpu_custom_call.1} parent=1 // pred_region
      %87 = dma.done [#allocation10], 16
    $region45: #{tpu_custom_call.1} parent=1 // pred_fallthru
      _
    // Predicated region
    $region46: #{tpu_custom_call.1} parent=1 // pred_check
      _
    $region47: #{tpu_custom_call.1} parent=1 // pred_check_branch
      %89 = sbr.rel (0) target = $region49
    $region48: #{tpu_custom_call.1} parent=1 // pred_region
      %90 = dma.done [#allocation10], 256
    $region49: #{tpu_custom_call.1} parent=1 // pred_fallthru
      _
    %p91 = scmp.eq.s32.totalorder 0, 0
    // Predicated region
    $region50: #{tpu_custom_call.1} parent=1 // pred_check
      %p92 = pneg %p91
    $region51: #{tpu_custom_call.1} parent=1 // pred_check_branch
      %94 = sbr.rel (%p92) target = $region53
    $region52: #{tpu_custom_call.1} parent=1 // pred_region
      %v95 = vld [vmem:[#allocation3] sm:$0xff]
      %v96 = vld [vmem:[#allocation3 + $0x8] sm:$0xff]
      %v97 = vld [vmem:[#allocation6] sm:$0xff]
      %v98 = vld [vmem:[#allocation6 + $0x8] sm:$0xff]
      %v99 = vld [vmem:[#allocation6 + $0x10] sm:$0xff]
      %v100 = vld [vmem:[#allocation6 + $0x18] sm:$0xff]
      %v101 = vld [vmem:[#allocation6 + $0x20] sm:$0xff]
      %v102 = vld [vmem:[#allocation6 + $0x28] sm:$0xff]
      %v103 = vld [vmem:[#allocation6 + $0x30] sm:$0xff]
      %v104 = vld [vmem:[#allocation6 + $0x38] sm:$0xff]
      %v105 = vld [vmem:[%s2] sm:$0x1]
      %v107 = vlaneseq
      %v108 = vshrl.u32 %v107, 7
      %v109 = vsub.s32 0, %v108
      %v110 = vrot.slane %v105, %v109
      %vm112 = vcmask 523264
      %v114 = vsel %vm112, %v95, 0
      %v117 = vsel %vm112, %v96, 0
      %119 = vmatprep.subr.mxu0 0.0
      %120 = vmatpush1.msra.mxu0 0.0
      %121 = vmatprep.subr.mxu0 0.0
      %122 = vmatpush1.msra.mxu0 0.0
      %123 = vmatprep.subr.mxu0 0.0
      %124 = vmatpush1.msra.mxu0 0.0
      %125 = vmatprep.subr.mxu0 0.0
      %126 = vmatpush1.msra.mxu0 0.0
      %127 = vmatprep.subr.mxu0 0.0
      %128 = vmatpush1.msra.mxu0 0.0
      %129 = vmatprep.subr.mxu0 0.0
      %130 = vmatpush1.msra.mxu0 0.0
      %131 = vmatprep.subr.mxu0 0.0
      %132 = vmatpush1.msra.mxu0 0.0
      %133 = vmatprep.subr.mxu0 0.0
      %134 = vmatpush1.msra.mxu0 0.0
      %135 = vmatprep.subr.mxu0 0.0
      %136 = vmatpush1.msra.mxu0 %v104
      %137 = vmatprep.subr.mxu0 0.0
      %138 = vmatpush1.msra.mxu0 %v103
      %139 = vmatprep.subr.mxu0 0.0
      %140 = vmatpush1.msra.mxu0 %v102
      %141 = vmatprep.subr.mxu0 0.0
      %142 = vmatpush1.msra.mxu0 %v101
      %143 = vmatprep.subr.mxu0 0.0
      %144 = vmatpush1.msra.mxu0 %v100
      %145 = vmatprep.subr.mxu0 0.0
      %146 = vmatpush1.msra.mxu0 %v99
      %147 = vmatprep.subr.mxu0 0.0
      %148 = vmatpush1.msra.mxu0 %v98
      %149 = vmatprep.subr.mxu0 0.0
      %150 = vmatpush1.msra.mxu0 %v97
      %151 = vmatprep.subr.mxu0 0.0
      %152 = vmatpush2.msra.mxu0 0.0
      %153 = vmatprep.subr.mxu0 0.0
      %154 = vmatpush2.msra.mxu0 0.0
      %155 = vmatprep.subr.mxu0 0.0
      %156 = vmatpush2.msra.mxu0 0.0
      %157 = vmatprep.subr.mxu0 0.0
      %158 = vmatpush2.msra.mxu0 0.0
      %159 = vmatprep.subr.mxu0 0.0
      %160 = vmatpush2.msra.mxu0 0.0
      %161 = vmatprep.subr.mxu0 0.0
      %162 = vmatpush2.msra.mxu0 0.0
      %163 = vmatprep.subr.mxu0 0.0
      %164 = vmatpush2.msra.mxu0 0.0
      %165 = vmatprep.subr.mxu0 0.0
      %166 = vmatpush2.msra.mxu0 0.0
      %167 = vmatprep.subr.mxu0 0.0
      %168 = vmatpush2.msra.mxu0 0.0
      %169 = vmatprep.subr.mxu0 0.0
      %170 = vmatpush2.msra.mxu0 0.0
      %171 = vmatprep.subr.mxu0 0.0
      %172 = vmatpush2.msra.mxu0 0.0
      %173 = vmatprep.subr.mxu0 0.0
      %174 = vmatpush2.msra.mxu0 0.0
      %175 = vmatprep.subr.mxu0 0.0
      %176 = vmatpush2.msra.mxu0 0.0
      %177 = vmatprep.subr.mxu0 0.0
      %178 = vmatpush2.msra.mxu0 0.0
      %179 = vmatprep.subr.mxu0 0.0
      %180 = vmatpush2.msra.mxu0 0.0
      %181 = vmatprep.subr.mxu0 0.0
      %182 = vmatpush2.msra.mxu0 0.0
      %183 = vmatprep.mubr.f32.mxu0 0.0
      %184 = vmatmul.mubr.f32.gmra.mxu0 %v114
      %v185 = vpop.f32.mrf.mxu0
      %v186 = vadd.f32 %v110, %v185
      %v187 = vpop.f32.mrf.mxu0
      %188 = vmatprep.mubr.f32.mxu0 0.0
      %189 = vmatmul.mubr.f32.gmra.mxu0 %v117
      %v190 = vpop.f32.mrf.mxu0
      %v191 = vadd.f32 %v110, %v190
      %v192 = vpop.f32.mrf.mxu0
      %193 = vdwg.mxu0
      %v194 = vadd.f32 %v186, %v191
      %v195 = vrot.slane %v194, 4
      %v196 = vadd.f32 %v194, %v195
      %v197 = vrot.slane %v196, 2
      %v198 = vadd.f32 %v196, %v197
      %v199 = vrot.slane %v198, 1
      %v200 = vadd.f32 %v198, %v199
      %v201 = vrcp.pop 16.0
      %v202 = vmul.f32 %v200, %v201
      %v203 = vsub.f32 %v186, %v202
      %v204 = vsub.f32 %v191, %v202
      %v205 = vmul.f32 %v203, %v203
      %v206 = vmul.f32 %v204, %v204
      %v207 = vadd.f32 %v205, %v206
      %v208 = vrot.slane %v207, 4
      %v209 = vadd.f32 %v207, %v208
      %v210 = vrot.slane %v209, 2
      %v211 = vadd.f32 %v209, %v210
      %v212 = vrot.slane %v211, 1
      %v213 = vadd.f32 %v211, %v212
      %v214 = vmul.f32 %v213, %v201
      %v215 = vadd.f32 %v214, 1e-05
      %v216 = vrsqrt.pop %v215
      %v217 = vmul.f32 %v203, %v216
      %v218 = vmul.f32 %v204, %v216
      %v219 = vld [vmem:[#allocation8] sm:$0x1]
      %v221 = vlaneseq
      %v222 = vshrl.u32 %v221, 7
      %v223 = vsub.s32 0, %v222
      %v224 = vrot.slane %v219, %v223
      %v226 = vmul.f32 %v217, %v224
      %v227 = vmul.f32 %v218, %v224
      %v228 = vld [vmem:[#allocation9] sm:$0x1]
      %v230 = vlaneseq
      %v231 = vshrl.u32 %v230, 7
      %v232 = vsub.s32 0, %v231
      %v233 = vrot.slane %v228, %v232
      %v235 = vadd.f32 %v226, %v233
      %v236 = vadd.f32 %v227, %v233
      %237 = vst [vmem:[#allocation2] sm:$0xff] %v235
      %238 = vst [vmem:[#allocation2 + $0x8] sm:$0xff] %v236
    $region53: #{tpu_custom_call.1} parent=1 // pred_fallthru
      _
    %v239 = vld [vmem:[%s5] sm:$0xff]
    %v240 = vld [vmem:[#allocation2] sm:$0xff]
    %v241 = vld [vmem:[#allocation2 + $0x8] sm:$0xff]
    %v242 = vld [vmem:[#allocation11] sm:$0xff]
    %v243 = vld [vmem:[#allocation11 + $0x8] sm:$0xff]
    %v245 = vcombine.high %v239, %v239
    %v247 = vunpack.c.l.s4 1966171168
    %v248 = vunpack.c.0.s8 %v247
    %v249 = vlaneseq
    %v250 = vshrl.u32 %v249, 7
    %v251 = vsub.s32 %v248, %v250
    %v252 = vrot.slane %v239, %v251
    %v254 = vunpack.c.l.s4 1966171168
    %v255 = vunpack.c.0.s8 %v254
    %v256 = vlaneseq
    %v257 = vshrl.u32 %v256, 7
    %v258 = vsub.s32 %v255, %v257
    %v259 = vrot.slane %v245, %v258
    %v260 = vcombine.high %v252, %v252
    %v261 = vcombine.high %v259, %v259
    %v263 = vunpack.c.l.s4 1966171168
    %v264 = vunpack.c.0.s8 %v263
    %v265 = vlaneseq
    %v266 = vshrl.u32 %v265, 7
    %v267 = vsub.s32 %v264, %v266
    %v268 = vrot.slane %v252, %v267
    %v270 = vunpack.c.l.s4 1966171168
    %v271 = vunpack.c.0.s8 %v270
    %v272 = vlaneseq
    %v273 = vshrl.u32 %v272, 7
    %v274 = vsub.s32 %v271, %v273
    %v275 = vrot.slane %v259, %v274
    %v277 = vunpack.c.l.s4 1966171168
    %v278 = vunpack.c.0.s8 %v277
    %v279 = vlaneseq
    %v280 = vshrl.u32 %v279, 7
    %v281 = vsub.s32 %v278, %v280
    %v282 = vrot.slane %v260, %v281
    %v284 = vunpack.c.l.s4 1966171168
    %v285 = vunpack.c.0.s8 %v284
    %v286 = vlaneseq
    %v287 = vshrl.u32 %v286, 7
    %v288 = vsub.s32 %v285, %v287
    %v289 = vrot.slane %v261, %v288
    %v290 = vcombine.high %v268, %v268
    %v291 = vcombine.high %v275, %v275
    %v292 = vcombine.high %v282, %v282
    %v293 = vcombine.high %v289, %v289
    %v294 = vlaneseq
    %v295 = vshrl.u32 %v294, 7
    %v296 = vsub.s32 0, %v295
    %v297 = vrot.slane %v268, %v296
    %v298 = vlaneseq
    %v299 = vshrl.u32 %v298, 7
    %v300 = vsub.s32 0, %v299
    %v301 = vrot.slane %v282, %v300
    %v302 = vlaneseq
    %v303 = vshrl.u32 %v302, 7
    %v304 = vsub.s32 0, %v303
    %v305 = vrot.slane %v290, %v304
    %v306 = vlaneseq
    %v307 = vshrl.u32 %v306, 7
    %v308 = vsub.s32 0, %v307
    %v309 = vrot.slane %v292, %v308
    %v310 = vlaneseq
    %v311 = vshrl.u32 %v310, 7
    %v312 = vsub.s32 0, %v311
    %v313 = vrot.slane %v275, %v312
    %v314 = vlaneseq
    %v315 = vshrl.u32 %v314, 7
    %v316 = vsub.s32 0, %v315
    %v317 = vrot.slane %v289, %v316
    %v318 = vlaneseq
    %v319 = vshrl.u32 %v318, 7
    %v320 = vsub.s32 0, %v319
    %v321 = vrot.slane %v291, %v320
    %v322 = vlaneseq
    %v323 = vshrl.u32 %v322, 7
    %v324 = vsub.s32 0, %v323
    %v325 = vrot.slane %v293, %v324
    %v334 = vmul.f32 %v297, %v240
    %v335 = vmul.f32 %v297, %v241
    %v336 = vmul.f32 %v301, %v240
    %v337 = vmul.f32 %v301, %v241
    %v338 = vmul.f32 %v305, %v240
    %v339 = vmul.f32 %v305, %v241
    %v340 = vmul.f32 %v309, %v240
    %v341 = vmul.f32 %v309, %v241
    %v342 = vmul.f32 %v313, %v240
    %v343 = vmul.f32 %v313, %v241
    %v344 = vmul.f32 %v317, %v240
    %v345 = vmul.f32 %v317, %v241
    %v346 = vmul.f32 %v321, %v240
    %v347 = vmul.f32 %v321, %v241
    %v348 = vmul.f32 %v325, %v240
    %v349 = vmul.f32 %v325, %v241
    %v350 = vrot.slane %v334, 4
    %v351 = vmax.f32 %v334, %v350
    %v352 = vrot.slane %v351, 2
    %v353 = vmax.f32 %v351, %v352
    %v354 = vrot.slane %v353, 1
    %v355 = vmax.f32 %v353, %v354
    %v356 = vrot.slane %v335, 4
    %v357 = vmax.f32 %v335, %v356
    %v358 = vrot.slane %v357, 2
    %v359 = vmax.f32 %v357, %v358
    %v360 = vrot.slane %v359, 1
    %v361 = vmax.f32 %v359, %v360
    %v362 = vrot.slane %v336, 4
    %v363 = vmax.f32 %v336, %v362
    %v364 = vrot.slane %v363, 2
    %v365 = vmax.f32 %v363, %v364
    %v366 = vrot.slane %v365, 1
    %v367 = vmax.f32 %v365, %v366
    %v368 = vrot.slane %v337, 4
    %v369 = vmax.f32 %v337, %v368
    %v370 = vrot.slane %v369, 2
    %v371 = vmax.f32 %v369, %v370
    %v372 = vrot.slane %v371, 1
    %v373 = vmax.f32 %v371, %v372
    %v374 = vrot.slane %v338, 4
    %v375 = vmax.f32 %v338, %v374
    %v376 = vrot.slane %v375, 2
    %v377 = vmax.f32 %v375, %v376
    %v378 = vrot.slane %v377, 1
    %v379 = vmax.f32 %v377, %v378
    %v380 = vrot.slane %v339, 4
    %v381 = vmax.f32 %v339, %v380
    %v382 = vrot.slane %v381, 2
    %v383 = vmax.f32 %v381, %v382
    %v384 = vrot.slane %v383, 1
    %v385 = vmax.f32 %v383, %v384
    %v386 = vrot.slane %v340, 4
    %v387 = vmax.f32 %v340, %v386
    %v388 = vrot.slane %v387, 2
    %v389 = vmax.f32 %v387, %v388
    %v390 = vrot.slane %v389, 1
    %v391 = vmax.f32 %v389, %v390
    %v392 = vrot.slane %v341, 4
    %v393 = vmax.f32 %v341, %v392
    %v394 = vrot.slane %v393, 2
    %v395 = vmax.f32 %v393, %v394
    %v396 = vrot.slane %v395, 1
    %v397 = vmax.f32 %v395, %v396
    %v398 = vrot.slane %v342, 4
    %v399 = vmax.f32 %v342, %v398
    %v400 = vrot.slane %v399, 2
    %v401 = vmax.f32 %v399, %v400
    %v402 = vrot.slane %v401, 1
    %v403 = vmax.f32 %v401, %v402
    %v404 = vrot.slane %v343, 4
    %v405 = vmax.f32 %v343, %v404
    %v406 = vrot.slane %v405, 2
    %v407 = vmax.f32 %v405, %v406
    %v408 = vrot.slane %v407, 1
    %v409 = vmax.f32 %v407, %v408
    %v410 = vrot.slane %v344, 4
    %v411 = vmax.f32 %v344, %v410
    %v412 = vrot.slane %v411, 2
    %v413 = vmax.f32 %v411, %v412
    %v414 = vrot.slane %v413, 1
    %v415 = vmax.f32 %v413, %v414
    %v416 = vrot.slane %v345, 4
    %v417 = vmax.f32 %v345, %v416
    %v418 = vrot.slane %v417, 2
    %v419 = vmax.f32 %v417, %v418
    %v420 = vrot.slane %v419, 1
    %v421 = vmax.f32 %v419, %v420
    %v422 = vrot.slane %v346, 4
    %v423 = vmax.f32 %v346, %v422
    %v424 = vrot.slane %v423, 2
    %v425 = vmax.f32 %v423, %v424
    %v426 = vrot.slane %v425, 1
    %v427 = vmax.f32 %v425, %v426
    %v428 = vrot.slane %v347, 4
    %v429 = vmax.f32 %v347, %v428
    %v430 = vrot.slane %v429, 2
    %v431 = vmax.f32 %v429, %v430
    %v432 = vrot.slane %v431, 1
    %v433 = vmax.f32 %v431, %v432
    %v434 = vrot.slane %v348, 4
    %v435 = vmax.f32 %v348, %v434
    %v436 = vrot.slane %v435, 2
    %v437 = vmax.f32 %v435, %v436
    %v438 = vrot.slane %v437, 1
    %v439 = vmax.f32 %v437, %v438
    %v440 = vrot.slane %v349, 4
    %v441 = vmax.f32 %v349, %v440
    %v442 = vrot.slane %v441, 2
    %v443 = vmax.f32 %v441, %v442
    %v444 = vrot.slane %v443, 1
    %v445 = vmax.f32 %v443, %v444
    %v446 = vsub.f32 %v334, %v355
    %v447 = vsub.f32 %v335, %v361
    %v448 = vsub.f32 %v336, %v367
    %v449 = vsub.f32 %v337, %v373
    %v450 = vsub.f32 %v338, %v379
    %v451 = vsub.f32 %v339, %v385
    %v452 = vsub.f32 %v340, %v391
    %v453 = vsub.f32 %v341, %v397
    %v454 = vsub.f32 %v342, %v403
    %v455 = vsub.f32 %v343, %v409
    %v456 = vsub.f32 %v344, %v415
    %v457 = vsub.f32 %v345, %v421
    %v458 = vsub.f32 %v346, %v427
    %v459 = vsub.f32 %v347, %v433
    %v460 = vsub.f32 %v348, %v439
    %v461 = vsub.f32 %v349, %v445
    %v462 = vmul.f32 %v446, 1.442695
    %v463 = vpow.pop %v462
    %v464 = vmul.f32 %v447, 1.442695
    %v465 = vpow.pop %v464
    %v466 = vmul.f32 %v448, 1.442695
    %v467 = vpow.pop %v466
    %v468 = vmul.f32 %v449, 1.442695
    %v469 = vpow.pop %v468
    %v470 = vmul.f32 %v450, 1.442695
    %v471 = vpow.pop %v470
    %v472 = vmul.f32 %v451, 1.442695
    %v473 = vpow.pop %v472
    %v474 = vmul.f32 %v452, 1.442695
    %v475 = vpow.pop %v474
    %v476 = vmul.f32 %v453, 1.442695
    %v477 = vpow.pop %v476
    %v478 = vmul.f32 %v454, 1.442695
    %v479 = vpow.pop %v478
    %v480 = vmul.f32 %v455, 1.442695
    %v481 = vpow.pop %v480
    %v482 = vmul.f32 %v456, 1.442695
    %v483 = vpow.pop %v482
    %v484 = vmul.f32 %v457, 1.442695
    %v485 = vpow.pop %v484
    %v486 = vmul.f32 %v458, 1.442695
    %v487 = vpow.pop %v486
    %v488 = vmul.f32 %v459, 1.442695
    %v489 = vpow.pop %v488
    %v490 = vmul.f32 %v460, 1.442695
    %v491 = vpow.pop %v490
    %v492 = vmul.f32 %v461, 1.442695
    %v493 = vpow.pop %v492
    %v494 = vmul.f32 %v463, %v242
    %v495 = vmul.f32 %v465, %v243
    %v496 = vmul.f32 %v467, %v242
    %v497 = vmul.f32 %v469, %v243
    %v498 = vmul.f32 %v471, %v242
    %v499 = vmul.f32 %v473, %v243
    %v500 = vmul.f32 %v475, %v242
    %v501 = vmul.f32 %v477, %v243
    %v502 = vmul.f32 %v479, %v242
    %v503 = vmul.f32 %v481, %v243
    %v504 = vmul.f32 %v483, %v242
    %v505 = vmul.f32 %v485, %v243
    %v506 = vmul.f32 %v487, %v242
    %v507 = vmul.f32 %v489, %v243
    %v508 = vmul.f32 %v491, %v242
    %v509 = vmul.f32 %v493, %v243
    %v510 = vrot.slane %v494, 4
    %v511 = vadd.f32 %v494, %v510
    %v512 = vrot.slane %v511, 2
    %v513 = vadd.f32 %v511, %v512
    %v514 = vrot.slane %v513, 1
    %v515 = vadd.f32 %v513, %v514
    %v516 = vrot.slane %v495, 4
    %v517 = vadd.f32 %v495, %v516
    %v518 = vrot.slane %v517, 2
    %v519 = vadd.f32 %v517, %v518
    %v520 = vrot.slane %v519, 1
    %v521 = vadd.f32 %v519, %v520
    %v522 = vrot.slane %v496, 4
    %v523 = vadd.f32 %v496, %v522
    %v524 = vrot.slane %v523, 2
    %v525 = vadd.f32 %v523, %v524
    %v526 = vrot.slane %v525, 1
    %v527 = vadd.f32 %v525, %v526
    %v528 = vrot.slane %v497, 4
    %v529 = vadd.f32 %v497, %v528
    %v530 = vrot.slane %v529, 2
    %v531 = vadd.f32 %v529, %v530
    %v532 = vrot.slane %v531, 1
    %v533 = vadd.f32 %v531, %v532
    %v534 = vrot.slane %v498, 4
    %v535 = vadd.f32 %v498, %v534
    %v536 = vrot.slane %v535, 2
    %v537 = vadd.f32 %v535, %v536
    %v538 = vrot.slane %v537, 1
    %v539 = vadd.f32 %v537, %v538
    %v540 = vrot.slane %v499, 4
    %v541 = vadd.f32 %v499, %v540
    %v542 = vrot.slane %v541, 2
    %v543 = vadd.f32 %v541, %v542
    %v544 = vrot.slane %v543, 1
    %v545 = vadd.f32 %v543, %v544
    %v546 = vrot.slane %v500, 4
    %v547 = vadd.f32 %v500, %v546
    %v548 = vrot.slane %v547, 2
    %v549 = vadd.f32 %v547, %v548
    %v550 = vrot.slane %v549, 1
    %v551 = vadd.f32 %v549, %v550
    %v552 = vrot.slane %v501, 4
    %v553 = vadd.f32 %v501, %v552
    %v554 = vrot.slane %v553, 2
    %v555 = vadd.f32 %v553, %v554
    %v556 = vrot.slane %v555, 1
    %v557 = vadd.f32 %v555, %v556
    %v558 = vrot.slane %v502, 4
    %v559 = vadd.f32 %v502, %v558
    %v560 = vrot.slane %v559, 2
    %v561 = vadd.f32 %v559, %v560
    %v562 = vrot.slane %v561, 1
    %v563 = vadd.f32 %v561, %v562
    %v564 = vrot.slane %v503, 4
    %v565 = vadd.f32 %v503, %v564
    %v566 = vrot.slane %v565, 2
    %v567 = vadd.f32 %v565, %v566
    %v568 = vrot.slane %v567, 1
    %v569 = vadd.f32 %v567, %v568
    %v570 = vrot.slane %v504, 4
    %v571 = vadd.f32 %v504, %v570
    %v572 = vrot.slane %v571, 2
    %v573 = vadd.f32 %v571, %v572
    %v574 = vrot.slane %v573, 1
    %v575 = vadd.f32 %v573, %v574
    %v576 = vrot.slane %v505, 4
    %v577 = vadd.f32 %v505, %v576
    %v578 = vrot.slane %v577, 2
    %v579 = vadd.f32 %v577, %v578
    %v580 = vrot.slane %v579, 1
    %v581 = vadd.f32 %v579, %v580
    %v582 = vrot.slane %v506, 4
    %v583 = vadd.f32 %v506, %v582
    %v584 = vrot.slane %v583, 2
    %v585 = vadd.f32 %v583, %v584
    %v586 = vrot.slane %v585, 1
    %v587 = vadd.f32 %v585, %v586
    %v588 = vrot.slane %v507, 4
    %v589 = vadd.f32 %v507, %v588
    %v590 = vrot.slane %v589, 2
    %v591 = vadd.f32 %v589, %v590
    %v592 = vrot.slane %v591, 1
    %v593 = vadd.f32 %v591, %v592
    %v594 = vrot.slane %v508, 4
    %v595 = vadd.f32 %v508, %v594
    %v596 = vrot.slane %v595, 2
    %v597 = vadd.f32 %v595, %v596
    %v598 = vrot.slane %v597, 1
    %v599 = vadd.f32 %v597, %v598
    %v600 = vrot.slane %v509, 4
    %v601 = vadd.f32 %v509, %v600
    %v602 = vrot.slane %v601, 2
    %v603 = vadd.f32 %v601, %v602
    %v604 = vrot.slane %v603, 1
    %v605 = vadd.f32 %v603, %v604
    %v606 = vrot.slane %v463, 4
    %v607 = vadd.f32 %v463, %v606
    %v608 = vrot.slane %v607, 2
    %v609 = vadd.f32 %v607, %v608
    %v610 = vrot.slane %v609, 1
    %v611 = vadd.f32 %v609, %v610
    %v612 = vrot.slane %v465, 4
    %v613 = vadd.f32 %v465, %v612
    %v614 = vrot.slane %v613, 2
    %v615 = vadd.f32 %v613, %v614
    %v616 = vrot.slane %v615, 1
    %v617 = vadd.f32 %v615, %v616
    %v618 = vrot.slane %v467, 4
    %v619 = vadd.f32 %v467, %v618
    %v620 = vrot.slane %v619, 2
    %v621 = vadd.f32 %v619, %v620
    %v622 = vrot.slane %v621, 1
    %v623 = vadd.f32 %v621, %v622
    %v624 = vrot.slane %v469, 4
    %v625 = vadd.f32 %v469, %v624
    %v626 = vrot.slane %v625, 2
    %v627 = vadd.f32 %v625, %v626
    %v628 = vrot.slane %v627, 1
    %v629 = vadd.f32 %v627, %v628
    %v630 = vrot.slane %v471, 4
    %v631 = vadd.f32 %v471, %v630
    %v632 = vrot.slane %v631, 2
    %v633 = vadd.f32 %v631, %v632
    %v634 = vrot.slane %v633, 1
    %v635 = vadd.f32 %v633, %v634
    %v636 = vrot.slane %v473, 4
    %v637 = vadd.f32 %v473, %v636
    %v638 = vrot.slane %v637, 2
    %v639 = vadd.f32 %v637, %v638
    %v640 = vrot.slane %v639, 1
    %v641 = vadd.f32 %v639, %v640
    %v642 = vrot.slane %v475, 4
    %v643 = vadd.f32 %v475, %v642
    %v644 = vrot.slane %v643, 2
    %v645 = vadd.f32 %v643, %v644
    %v646 = vrot.slane %v645, 1
    %v647 = vadd.f32 %v645, %v646
    %v648 = vrot.slane %v477, 4
    %v649 = vadd.f32 %v477, %v648
    %v650 = vrot.slane %v649, 2
    %v651 = vadd.f32 %v649, %v650
    %v652 = vrot.slane %v651, 1
    %v653 = vadd.f32 %v651, %v652
    %v654 = vrot.slane %v479, 4
    %v655 = vadd.f32 %v479, %v654
    %v656 = vrot.slane %v655, 2
    %v657 = vadd.f32 %v655, %v656
    %v658 = vrot.slane %v657, 1
    %v659 = vadd.f32 %v657, %v658
    %v660 = vrot.slane %v481, 4
    %v661 = vadd.f32 %v481, %v660
    %v662 = vrot.slane %v661, 2
    %v663 = vadd.f32 %v661, %v662
    %v664 = vrot.slane %v663, 1
    %v665 = vadd.f32 %v663, %v664
    %v666 = vrot.slane %v483, 4
    %v667 = vadd.f32 %v483, %v666
    %v668 = vrot.slane %v667, 2
    %v669 = vadd.f32 %v667, %v668
    %v670 = vrot.slane %v669, 1
    %v671 = vadd.f32 %v669, %v670
    %v672 = vrot.slane %v485, 4
    %v673 = vadd.f32 %v485, %v672
    %v674 = vrot.slane %v673, 2
    %v675 = vadd.f32 %v673, %v674
    %v676 = vrot.slane %v675, 1
    %v677 = vadd.f32 %v675, %v676
    %v678 = vrot.slane %v487, 4
    %v679 = vadd.f32 %v487, %v678
    %v680 = vrot.slane %v679, 2
    %v681 = vadd.f32 %v679, %v680
    %v682 = vrot.slane %v681, 1
    %v683 = vadd.f32 %v681, %v682
    %v684 = vrot.slane %v489, 4
    %v685 = vadd.f32 %v489, %v684
    %v686 = vrot.slane %v685, 2
    %v687 = vadd.f32 %v685, %v686
    %v688 = vrot.slane %v687, 1
    %v689 = vadd.f32 %v687, %v688
    %v690 = vrot.slane %v491, 4
    %v691 = vadd.f32 %v491, %v690
    %v692 = vrot.slane %v691, 2
    %v693 = vadd.f32 %v691, %v692
    %v694 = vrot.slane %v693, 1
    %v695 = vadd.f32 %v693, %v694
    %v696 = vrot.slane %v493, 4
    %v697 = vadd.f32 %v493, %v696
    %v698 = vrot.slane %v697, 2
    %v699 = vadd.f32 %v697, %v698
    %v700 = vrot.slane %v699, 1
    %v701 = vadd.f32 %v699, %v700
    %v702 = vrcp.pop %v611
    %v703 = vrcp.pop %v617
    %v704 = vrcp.pop %v623
    %v705 = vrcp.pop %v629
    %v706 = vrcp.pop %v635
    %v707 = vrcp.pop %v641
    %v708 = vrcp.pop %v647
    %v709 = vrcp.pop %v653
    %v710 = vrcp.pop %v659
    %v711 = vrcp.pop %v665
    %v712 = vrcp.pop %v671
    %v713 = vrcp.pop %v677
    %v714 = vrcp.pop %v683
    %v715 = vrcp.pop %v689
    %v716 = vrcp.pop %v695
    %v717 = vrcp.pop %v701
    %v718 = vmul.f32 %v515, %v702
    %v719 = vmul.f32 %v521, %v703
    %v720 = vmul.f32 %v527, %v704
    %v721 = vmul.f32 %v533, %v705
    %v722 = vmul.f32 %v539, %v706
    %v723 = vmul.f32 %v545, %v707
    %v724 = vmul.f32 %v551, %v708
    %v725 = vmul.f32 %v557, %v709
    %v726 = vmul.f32 %v563, %v710
    %v727 = vmul.f32 %v569, %v711
    %v728 = vmul.f32 %v575, %v712
    %v729 = vmul.f32 %v581, %v713
    %v730 = vmul.f32 %v587, %v714
    %v731 = vmul.f32 %v593, %v715
    %v732 = vmul.f32 %v599, %v716
    %v733 = vmul.f32 %v605, %v717
    %vm750 = vcmask 1041409
    %v751 = vsel %vm750, %v719, %v718
    %v752 = vsel %vm750, %v721, %v720
    %v753 = vsel %vm750, %v723, %v722
    %v754 = vsel %vm750, %v725, %v724
    %v755 = vsel %vm750, %v727, %v726
    %v756 = vsel %vm750, %v729, %v728
    %v757 = vsel %vm750, %v731, %v730
    %v758 = vsel %vm750, %v733, %v732
    %767 = vst [vmem:[#allocation12] sm:$0x3] %v751
    %768 = vst [vmem:[#allocation12 + $0x2] sm:$0x3] %v752
    %769 = vst [vmem:[#allocation12 + $0x4] sm:$0x3] %v753
    %770 = vst [vmem:[#allocation12 + $0x6] sm:$0x3] %v754
    %771 = vst [vmem:[#allocation12 + $0x8] sm:$0x3] %v755
    %772 = vst [vmem:[#allocation12 + $0xa] sm:$0x3] %v756
    %773 = vst [vmem:[#allocation12 + $0xc] sm:$0x3] %v757
    %774 = vst [vmem:[#allocation12 + $0xe] sm:$0x3] %v758
    // Predicated region
    $region54: #{tpu_custom_call.1} parent=1 // pred_check
      _
    $region55: #{tpu_custom_call.1} parent=1 // pred_check_branch
      %776 = sbr.rel (0) target = $region57
    $region56: #{tpu_custom_call.1} parent=1 // pred_region
      %s778 = ssub.s32 256, 256
      %779 = vsyncadd [#allocation5], %s778
      %s780 = sshll.u32 [#allocation12], 4
      %s781 = int_to_ptr.vmem [resolvable:$true] %s780
      %786 = dma.vmem_to_hbm [thread:$0]  %s781, 256, %s7, [#allocation5], 32, 32, 2
    $region57: #{tpu_custom_call.1} parent=1 // pred_fallthru
      _
    // Predicated region
    $region58: #{tpu_custom_call.1} parent=1 // pred_check
      _
    $region59: #{tpu_custom_call.1} parent=1 // pred_check_branch
      %788 = sbr.rel (0) target = $region61
    $region60: #{tpu_custom_call.1} parent=1 // pred_region
      %789 = dma.done [#allocation5], 256
    $region61: #{tpu_custom_call.1} parent=1 // pred_fallthru
      _
    %790 = vsyncpa [#allocation4], 1
    %791 = vsyncpa [#allocation7], 1
    %792 = vsyncpa [#allocation10], 1
    %793 = vsyncpa [#allocation5], 1

</llo_original>
